<compile_context>
chip_gen: v7x
topology: tpu7x:2x2x1
jax: 0.10.0
libtpu: 0.0.40
codegen_flags: <defaults>
</compile_context>

<pallas_src>
import functools

import jax
import jax.numpy as jnp
from jax.experimental import pallas as pl
from jax.experimental.pallas import tpu as pltpu


def _tsm_conv1x1_kernel(x_ref, w_ref, b_ref, o_ref, *, fold, compute_dtype):
    """One (n, p-tile) grid step.

    x_ref block: (1, T, Pt, C) spanning the WHOLE temporal axis (each frame is
    DMA'd from HBM exactly once).  o_ref block: (1, T, Pt, Cout).
    The shift is realized per temporal chunk with static T-slices of x_ref and
    (1,1,C) channel-group masks (pure VPU selects, full-lane loads/stores), and
    each chunk feeds the MXU directly -- no concatenates, no shifted scratch.
    """
    _, T, Pt, C = x_ref.shape
    Cout = o_ref.shape[3]
    cd = compute_dtype

    # Small broadcastable channel-group masks (no block-sized iota temporary).
    c_idx = jax.lax.broadcasted_iota(jnp.int32, (1, 1, C), 2)
    m_next = c_idx < fold                                    # group 0: frame t+1
    m_prev = jnp.logical_and(c_idx >= fold, c_idx < 2 * fold)  # group 1: frame t-1
    zero = jnp.zeros((), dtype=x_ref.dtype)

    def conv_store(shifted, t_lo, t_hi):
        # 1x1 conv == channel matmul over (t_hi-t_lo)*Pt rows, f32 accumulation.
        rows = (t_hi - t_lo) * Pt
        lhs = shifted.reshape(rows, C).astype(cd)
        y = jnp.dot(lhs, w_ref[...], preferred_element_type=jnp.float32)
        y = y + b_ref[...]                                   # (1, Cout) f32 bias
        o_ref[0, t_lo:t_hi] = y.reshape(t_hi - t_lo, Pt, Cout).astype(o_ref.dtype)

    if T == 1:
        # Both temporal neighbours out of range -> groups 0 and 1 are zero.
        sh = jnp.where(jnp.logical_or(m_next, m_prev), zero, x_ref[0, 0:1])
        conv_store(sh, 0, 1)
        return

    # Frame 0: group0 <- x[1], group1 <- 0 (boundary), rest <- x[0].
    sh0 = jnp.where(m_next, x_ref[0, 1:2],
                    jnp.where(m_prev, zero, x_ref[0, 0:1]))
    conv_store(sh0, 0, 1)

    # Interior frames 1..T-2: group0 <- x[t+1], group1 <- x[t-1], rest <- x[t].
    if T > 2:
        sh_mid = jnp.where(m_next, x_ref[0, 2:T],
                           jnp.where(m_prev, x_ref[0, 0:T - 2], x_ref[0, 1:T - 1]))
        conv_store(sh_mid, 1, T - 1)

    # Frame T-1: group0 <- 0 (boundary), group1 <- x[T-2], rest <- x[T-1].
    sh_last = jnp.where(m_next, zero,
                        jnp.where(m_prev, x_ref[0, T - 2:T - 1], x_ref[0, T - 1:T]))
    conv_store(sh_last, T - 1, T)


def _default_vmem_budget():
    """Per-step VMEM budget derived from the local chip's physical VMEM.

    ~96 MiB on v5e/v6e (128 MiB physical per TensorCore); 48 MiB on v7x
    (64 MiB physical per TensorCore).
    """
    vmem_bytes = None
    try:
        vmem_bytes = int(getattr(pltpu.get_tpu_info(), "vmem_capacity_bytes", 0)) or None
    except Exception:
        vmem_bytes = None
    if vmem_bytes is None:
        kind = ""
        try:
            kind = jax.devices()[0].device_kind.lower()
        except Exception:
            pass
        vmem_bytes = (64 if "v7" in kind else 128) * 1024 * 1024
    return min((vmem_bytes * 3) // 4, 96 * 1024 * 1024)


def _choose_pt(P, N, T, C, Cout, in_item, cd_item, out_item,
               vmem_budget_bytes, min_steps=8):
    """Pick the spatial tile Pt.

    Budgets BOTH the double-buffered pipelined blocks and the in-kernel
    temporaries, packs Pt to the sublane granule of the narrower dtype, and
    shrinks Pt if needed so the grid has >= min_steps steps (v7x megacore +
    pipeline warm-up/drain hiding).
    """
    pack = max(8, 32 // min(in_item, cd_item))        # 8 f32, 16 bf16, 32 int8
    # Bytes per P-row (spanning all T frames):
    #   double-buffered input + output blocks,
    blocks = 2 * T * (C * in_item + Cout * out_item)
    #   in-kernel temporaries (worst chunk ~ all T frames): ~3 T-slice loads +
    #   2 nested-where results in input dtype, compute-dtype lhs, f32 result.
    temps = T * (5 * C * in_item + C * cd_item + 4 * Cout)
    per_row = blocks + temps
    w_bytes = 2 * (C * Cout * cd_item) + 2 * (4 * Cout)   # double-buffered W, b
    avail = max(0, int(vmem_budget_bytes * 0.9) - w_bytes)
    pt = max(pack, (avail // per_row) // pack * pack)
    if pt >= P:
        pt = P
    # Ensure enough grid steps (N * ceil(P/Pt)); per-step overhead ~0.35us is
    # negligible next to exposed DMA / idle second TensorCore on v7x.
    while pt > pack and N * ((P + pt - 1) // pt) < min_steps:
        smaller = max(pack, ((pt // 2) // pack) * pack)
        if smaller == pt:
            break
        pt = smaller
    return pt


def temporal_shift_conv1x1(x_ntpc, conv_weight, conv_bias, fold_div=8,
                           compute_dtype=None, vmem_budget_bytes=None):
    """Fused TSM shift + 1x1 conv on channels-last activations.

    x_ntpc: (N, T, P, C) with P = H*W.  conv_weight: (Cout, Cin[,1,1]).
    conv_bias: (Cout,).  This is the preferred entry point (no layout passes).
    """
    N, T, P, C = x_ntpc.shape
    fold = C // fold_div
    w2d = conv_weight.reshape(conv_weight.shape[0], C)
    Cout = w2d.shape[0]

    if compute_dtype is None:
        # bf16 MXU operands (f32 accumulation) halve matmul operand bytes and use
        # the native 256x256 bf16 MXU on v6e/v7x; the shift/select stays f32.
        compute_dtype = jnp.bfloat16 if x_ntpc.dtype == jnp.dtype(jnp.float32) \
            else x_ntpc.dtype
    compute_dtype = jnp.dtype(compute_dtype)

    in_item = jnp.dtype(x_ntpc.dtype).itemsize
    cd_item = compute_dtype.itemsize
    out_item = in_item                                  # output dtype == input dtype

    if vmem_budget_bytes is None:
        vmem_budget_bytes = _default_vmem_budget()
    Pt = _choose_pt(P, N, T, C, Cout, in_item, cd_item, out_item, vmem_budget_bytes)

    w_t = w2d.T.astype(compute_dtype)                   # (C, Cout): lane-dense RHS
    b = conv_bias.reshape(1, Cout).astype(jnp.float32)  # f32 bias, added post-MXU

    kernel = functools.partial(_tsm_conv1x1_kernel, fold=fold,
                               compute_dtype=compute_dtype)

    return pl.pallas_call(
        kernel,
        out_shape=jax.ShapeDtypeStruct((N, T, P, Cout), x_ntpc.dtype),
        grid=(N, pl.cdiv(P, Pt)),
        in_specs=[
            # Whole temporal axis in one block: each frame read from HBM once.
            pl.BlockSpec((1, T, Pt, C), lambda n, p: (n, 0, p, 0)),
            pl.BlockSpec((C, Cout), lambda n, p: (0, 0)),
            pl.BlockSpec((1, Cout), lambda n, p: (0, 0)),
        ],
        # Cout is never tiled: output stores stay full-lane / full MXU width.
        out_specs=pl.BlockSpec((1, T, Pt, Cout), lambda n, p: (n, 0, p, 0)),
        compiler_params=pltpu.CompilerParams(
            dimension_semantics=("parallel", "parallel"),   # megacore-shardable
            vmem_limit_bytes=int(vmem_budget_bytes),
        ),
    )(x_ntpc, w_t, b)


def temporal_shift_forward(x_nchw, conv_weight, conv_bias, n_segment, fold_div=8,
                           compute_dtype=None):
    """NCHW entry point matching the PyTorch module: (NT, C, H, W) -> (NT, Cout, H, W).

    The two layout passes below are harness-only glue; in a real model keep the
    activations channels-last and call temporal_shift_conv1x1 directly.
    TODO(synk): an NCHW-native kernel variant (block (1,T,C,Pt), channel select
    on the sublane axis) would remove these layout passes entirely.
    """
    NT, C, H, W = x_nchw.shape
    assert NT % n_segment == 0
    N, T, P = NT // n_segment, n_segment, H * W

    x = x_nchw.reshape(N, T, C, P).transpose(0, 1, 3, 2)          # (N, T, P, C)
    out = temporal_shift_conv1x1(x, conv_weight, conv_bias, fold_div, compute_dtype)
    Cout = out.shape[-1]
    return out.transpose(0, 1, 3, 2).reshape(NT, Cout, H, W)


def _reference_forward(x_nchw, conv_weight, conv_bias, n_segment, fold_div=8):
    """Pure-JAX reference mirroring the PyTorch code (for validation)."""
    NT, C, H, W = x_nchw.shape
    N = NT // n_segment
    x = x_nchw.reshape(N, n_segment, C, H, W)
    fold = C // fold_div
    out = jnp.zeros_like(x)
    out = out.at[:, :-1, :fold].set(x[:, 1:, :fold])
    out = out.at[:, 1:, fold:2 * fold].set(x[:, :-1, fold:2 * fold])
    out = out.at[:, :, 2 * fold:].set(x[:, :, 2 * fold:])
    out = out.reshape(NT, C, H, W)
    y = jnp.einsum('nchw,oc->nohw', out,
                   conv_weight.reshape(conv_weight.shape[0], C),
                   precision=jax.lax.Precision.HIGHEST)
    return y + conv_bias.reshape(1, -1, 1, 1)


if __name__ == "__main__":
    key = jax.random.PRNGKey(0)
    k_x, k_w, k_b = jax.random.split(key, 3)

    # Small but lane-dense config: C = Cout = 128 keeps every vreg/store full-width.
    n_segment = 4      # T
    n_batch = 2        # N
    C, H, W = 128, 8, 8
    fold_div = 8
    NT = n_batch * n_segment

    x = jax.random.normal(k_x, (NT, C, H, W), dtype=jnp.float32)
    # net = Conv2d(C, C, kernel_size=1, bias=True), deterministic synthetic init
    conv_w = 0.1 * jax.random.normal(k_w, (C, C, 1, 1), dtype=jnp.float32)
    conv_b = 0.05 * jax.random.normal(k_b, (C,), dtype=jnp.float32)

    y_ref = _reference_forward(x, conv_w, conv_b, n_segment, fold_div)

    # f32 compute path: tight check against the HIGHEST-precision reference.
    y32 = temporal_shift_forward(x, conv_w, conv_b, n_segment, fold_div,
                                 compute_dtype=jnp.float32)
    y32 = jax.block_until_ready(y32)
    assert y32.shape == (NT, C, H, W)
    assert jnp.allclose(y32, y_ref, atol=1e-3, rtol=1e-3), \
        float(jnp.max(jnp.abs(y32 - y_ref)))

    # Default path: bf16 MXU operands, f32 accumulation (tolerance scaled for K=128).
    ybf = temporal_shift_forward(x, conv_w, conv_b, n_segment, fold_div)
    ybf = jax.block_until_ready(ybf)
    assert ybf.shape == (NT, C, H, W)
    assert jnp.allclose(ybf, y_ref, atol=5e-2, rtol=5e-2), \
        float(jnp.max(jnp.abs(ybf - y_ref)))

    print("KERNEL_OK")
</pallas_src>

<mosaic_0001>
module attributes {stable_mosaic.version = 11 : i64} {
  func.func @_tsm_conv1x1_kernel(%arg0: i32, %arg1: i32, %arg2: memref<1x4x16x128xf32, #tpu.memory_space<vmem>>, %arg3: memref<128x128xf32, #tpu.memory_space<vmem>>, %arg4: memref<1x128xf32, #tpu.memory_space<vmem>>, %arg5: memref<1x4x16x128xf32, #tpu.memory_space<vmem>>) attributes {dimension_semantics = [#tpu.dimension_semantics<parallel>, #tpu.dimension_semantics<parallel>], iteration_bounds = array<i64: 2, 4>, scalar_prefetch = 0 : i64, scratch_operands = 0 : i64, tpu.core_type = #tpu.core_type<tc>, window_params = [{transform_indices = @transform_0, window_bounds = array<i64: 1, 4, 16, 128>}, {pipeline_mode = #tpu.pipeline_mode<synchronous>, transform_indices = @transform_1, window_bounds = array<i64: 128, 128>}, {pipeline_mode = #tpu.pipeline_mode<synchronous>, transform_indices = @transform_2, window_bounds = array<i64: 1, 128>}, {transform_indices = @transform_3, window_bounds = array<i64: 1, 4, 16, 128>}]} {
    %0 = tpu.iota {dimensions = array<i32: 2>} : vector<1x1x128xi32>
    %c16_i32 = arith.constant 16 : i32
    %1 = vector.broadcast %c16_i32 : i32 to vector<1x1x128xi32>
    %2 = arith.cmpi slt, %0, %1 : vector<1x1x128xi32>
    %c16_i32_0 = arith.constant 16 : i32
    %3 = vector.broadcast %c16_i32_0 : i32 to vector<1x1x128xi32>
    %4 = arith.cmpi sge, %0, %3 : vector<1x1x128xi32>
    %c32_i32 = arith.constant 32 : i32
    %5 = vector.broadcast %c32_i32 : i32 to vector<1x1x128xi32>
    %6 = arith.cmpi slt, %0, %5 : vector<1x1x128xi32>
    %7 = arith.andi %4, %6 : vector<1x1x128xi1>
    %c0 = arith.constant 0 : index
    %c1 = arith.constant 1 : index
    %c0_1 = arith.constant 0 : index
    %c0_2 = arith.constant 0 : index
    %8 = vector.load %arg2[%c0, %c1, %c0_1, %c0_2] : memref<1x4x16x128xf32, #tpu.memory_space<vmem>>, vector<1x1x16x128xf32>
    %9 = vector.shape_cast %8 : vector<1x1x16x128xf32> to vector<1x16x128xf32>
    %c0_3 = arith.constant 0 : index
    %c0_4 = arith.constant 0 : index
    %c0_5 = arith.constant 0 : index
    %c0_6 = arith.constant 0 : index
    %10 = vector.load %arg2[%c0_3, %c0_4, %c0_5, %c0_6] : memref<1x4x16x128xf32, #tpu.memory_space<vmem>>, vector<1x1x16x128xf32>
    %11 = vector.shape_cast %10 : vector<1x1x16x128xf32> to vector<1x16x128xf32>
    %cst = arith.constant 0.000000e+00 : f32
    %12 = vector.shape_cast %7 : vector<1x1x128xi1> to vector<1x1x128xi1>
    %13 = vector.broadcast %12 : vector<1x1x128xi1> to vector<1x16x128xi1>
    %14 = vector.broadcast %cst : f32 to vector<1x16x128xf32>
    %15 = arith.select %13, %14, %11 : vector<1x16x128xi1>, vector<1x16x128xf32>
    %16 = vector.shape_cast %2 : vector<1x1x128xi1> to vector<1x1x128xi1>
    %17 = vector.broadcast %16 : vector<1x1x128xi1> to vector<1x16x128xi1>
    %18 = arith.select %17, %9, %15 : vector<1x16x128xi1>, vector<1x16x128xf32>
    %19 = vector.shape_cast %18 : vector<1x16x128xf32> to vector<16x128xf32>
    %c0_7 = arith.constant 0 : index
    %c0_8 = arith.constant 0 : index
    %20 = vector.load %arg3[%c0_7, %c0_8] : memref<128x128xf32, #tpu.memory_space<vmem>>, vector<128x128xf32>
    %cst_9 = arith.constant dense<0.000000e+00> : vector<16x128xf32>
    %21 = tpu.matmul %19, %20, %cst_9 {dimension_numbers = #tpu.dot_dimension_numbers<[1], [0], [0], [1], [0, 0, 1, 1], [], []>} : vector<16x128xf32>, vector<128x128xf32>, vector<16x128xf32> -> vector<16x128xf32>
    %c0_10 = arith.constant 0 : index
    %c0_11 = arith.constant 0 : index
    %22 = vector.load %arg4[%c0_10, %c0_11] : memref<1x128xf32, #tpu.memory_space<vmem>>, vector<1x128xf32>
    %23 = vector.broadcast %22 : vector<1x128xf32> to vector<16x128xf32>
    %24 = arith.addf %21, %23 : vector<16x128xf32>
    %25 = vector.shape_cast %24 : vector<16x128xf32> to vector<1x16x128xf32>
    %c0_12 = arith.constant 0 : index
    %c0_13 = arith.constant 0 : index
    %c0_14 = arith.constant 0 : index
    %c0_15 = arith.constant 0 : index
    %26 = vector.load %arg5[%c0_12, %c0_13, %c0_14, %c0_15] : memref<1x4x16x128xf32, #tpu.memory_space<vmem>>, vector<1x1x16x128xf32>
    %27 = vector.shape_cast %26 : vector<1x1x16x128xf32> to vector<1x16x128xf32>
    %28 = vector.shape_cast %25 : vector<1x16x128xf32> to vector<1x1x16x128xf32>
    tpu.vector_store %arg5[%c0_12, %c0_13, %c0_14, %c0_15], %28 {strides = array<i32>} : memref<1x4x16x128xf32, #tpu.memory_space<vmem>>, vector<1x1x16x128xf32>,
    %c0_16 = arith.constant 0 : index
    %c2 = arith.constant 2 : index
    %c0_17 = arith.constant 0 : index
    %c0_18 = arith.constant 0 : index
    %29 = vector.load %arg2[%c0_16, %c2, %c0_17, %c0_18] : memref<1x4x16x128xf32, #tpu.memory_space<vmem>>, vector<1x2x16x128xf32>
    %30 = vector.shape_cast %29 : vector<1x2x16x128xf32> to vector<2x16x128xf32>
    %c0_19 = arith.constant 0 : index
    %c0_20 = arith.constant 0 : index
    %c0_21 = arith.constant 0 : index
    %c0_22 = arith.constant 0 : index
    %31 = vector.load %arg2[%c0_19, %c0_20, %c0_21, %c0_22] : memref<1x4x16x128xf32, #tpu.memory_space<vmem>>, vector<1x2x16x128xf32>
    %32 = vector.shape_cast %31 : vector<1x2x16x128xf32> to vector<2x16x128xf32>
    %c0_23 = arith.constant 0 : index
    %c1_24 = arith.constant 1 : index
    %c0_25 = arith.constant 0 : index
    %c0_26 = arith.constant 0 : index
    %33 = vector.load %arg2[%c0_23, %c1_24, %c0_25, %c0_26] : memref<1x4x16x128xf32, #tpu.memory_space<vmem>>, vector<1x2x16x128xf32>
    %34 = vector.shape_cast %33 : vector<1x2x16x128xf32> to vector<2x16x128xf32>
    %35 = vector.shape_cast %7 : vector<1x1x128xi1> to vector<1x1x128xi1>
    %36 = vector.broadcast %35 : vector<1x1x128xi1> to vector<2x16x128xi1>
    %37 = arith.select %36, %32, %34 : vector<2x16x128xi1>, vector<2x16x128xf32>
    %38 = vector.shape_cast %2 : vector<1x1x128xi1> to vector<1x1x128xi1>
    %39 = vector.broadcast %38 : vector<1x1x128xi1> to vector<2x16x128xi1>
    %40 = arith.select %39, %30, %37 : vector<2x16x128xi1>, vector<2x16x128xf32>
    %41 = vector.shape_cast %40 : vector<2x16x128xf32> to vector<32x128xf32>
    %c0_27 = arith.constant 0 : index
    %c0_28 = arith.constant 0 : index
    %42 = vector.load %arg3[%c0_27, %c0_28] : memref<128x128xf32, #tpu.memory_space<vmem>>, vector<128x128xf32>
    %cst_29 = arith.constant dense<0.000000e+00> : vector<32x128xf32>
    %43 = tpu.matmul %41, %42, %cst_29 {dimension_numbers = #tpu.dot_dimension_numbers<[1], [0], [0], [1], [0, 0, 1, 1], [], []>} : vector<32x128xf32>, vector<128x128xf32>, vector<32x128xf32> -> vector<32x128xf32>
    %c0_30 = arith.constant 0 : index
    %c0_31 = arith.constant 0 : index
    %44 = vector.load %arg4[%c0_30, %c0_31] : memref<1x128xf32, #tpu.memory_space<vmem>>, vector<1x128xf32>
    %45 = vector.broadcast %44 : vector<1x128xf32> to vector<32x128xf32>
    %46 = arith.addf %43, %45 : vector<32x128xf32>
    %47 = vector.shape_cast %46 : vector<32x128xf32> to vector<2x16x128xf32>
    %c0_32 = arith.constant 0 : index
    %c1_33 = arith.constant 1 : index
    %c0_34 = arith.constant 0 : index
    %c0_35 = arith.constant 0 : index
    %48 = vector.load %arg5[%c0_32, %c1_33, %c0_34, %c0_35] : memref<1x4x16x128xf32, #tpu.memory_space<vmem>>, vector<1x2x16x128xf32>
    %49 = vector.shape_cast %48 : vector<1x2x16x128xf32> to vector<2x16x128xf32>
    %50 = vector.shape_cast %47 : vector<2x16x128xf32> to vector<1x2x16x128xf32>
    tpu.vector_store %arg5[%c0_32, %c1_33, %c0_34, %c0_35], %50 {strides = array<i32>} : memref<1x4x16x128xf32, #tpu.memory_space<vmem>>, vector<1x2x16x128xf32>,
    %c0_36 = arith.constant 0 : index
    %c2_37 = arith.constant 2 : index
    %c0_38 = arith.constant 0 : index
    %c0_39 = arith.constant 0 : index
    %51 = vector.load %arg2[%c0_36, %c2_37, %c0_38, %c0_39] : memref<1x4x16x128xf32, #tpu.memory_space<vmem>>, vector<1x1x16x128xf32>
    %52 = vector.shape_cast %51 : vector<1x1x16x128xf32> to vector<1x16x128xf32>
    %c0_40 = arith.constant 0 : index
    %c3 = arith.constant 3 : index
    %c0_41 = arith.constant 0 : index
    %c0_42 = arith.constant 0 : index
    %53 = vector.load %arg2[%c0_40, %c3, %c0_41, %c0_42] : memref<1x4x16x128xf32, #tpu.memory_space<vmem>>, vector<1x1x16x128xf32>
    %54 = vector.shape_cast %53 : vector<1x1x16x128xf32> to vector<1x16x128xf32>
    %55 = vector.shape_cast %7 : vector<1x1x128xi1> to vector<1x1x128xi1>
    %56 = vector.broadcast %55 : vector<1x1x128xi1> to vector<1x16x128xi1>
    %57 = arith.select %56, %52, %54 : vector<1x16x128xi1>, vector<1x16x128xf32>
    %cst_43 = arith.constant 0.000000e+00 : f32
    %58 = vector.shape_cast %2 : vector<1x1x128xi1> to vector<1x1x128xi1>
    %59 = vector.broadcast %58 : vector<1x1x128xi1> to vector<1x16x128xi1>
    %60 = vector.broadcast %cst_43 : f32 to vector<1x16x128xf32>
    %61 = arith.select %59, %60, %57 : vector<1x16x128xi1>, vector<1x16x128xf32>
    %62 = vector.shape_cast %61 : vector<1x16x128xf32> to vector<16x128xf32>
    %c0_44 = arith.constant 0 : index
    %c0_45 = arith.constant 0 : index
    %63 = vector.load %arg3[%c0_44, %c0_45] : memref<128x128xf32, #tpu.memory_space<vmem>>, vector<128x128xf32>
    %cst_46 = arith.constant dense<0.000000e+00> : vector<16x128xf32>
    %64 = tpu.matmul %62, %63, %cst_46 {dimension_numbers = #tpu.dot_dimension_numbers<[1], [0], [0], [1], [0, 0, 1, 1], [], []>} : vector<16x128xf32>, vector<128x128xf32>, vector<16x128xf32> -> vector<16x128xf32>
    %c0_47 = arith.constant 0 : index
    %c0_48 = arith.constant 0 : index
    %65 = vector.load %arg4[%c0_47, %c0_48] : memref<1x128xf32, #tpu.memory_space<vmem>>, vector<1x128xf32>
    %66 = vector.broadcast %65 : vector<1x128xf32> to vector<16x128xf32>
    %67 = arith.addf %64, %66 : vector<16x128xf32>
    %68 = vector.shape_cast %67 : vector<16x128xf32> to vector<1x16x128xf32>
    %c0_49 = arith.constant 0 : index
    %c3_50 = arith.constant 3 : index
    %c0_51 = arith.constant 0 : index
    %c0_52 = arith.constant 0 : index
    %69 = vector.load %arg5[%c0_49, %c3_50, %c0_51, %c0_52] : memref<1x4x16x128xf32, #tpu.memory_space<vmem>>, vector<1x1x16x128xf32>
    %70 = vector.shape_cast %69 : vector<1x1x16x128xf32> to vector<1x16x128xf32>
    %71 = vector.shape_cast %68 : vector<1x16x128xf32> to vector<1x1x16x128xf32>
    tpu.vector_store %arg5[%c0_49, %c3_50, %c0_51, %c0_52], %71 {strides = array<i32>} : memref<1x4x16x128xf32, #tpu.memory_space<vmem>>, vector<1x1x16x128xf32>,
    return
  }
  func.func @transform_0(%arg0: i32, %arg1: i32) -> (i32, i32, i32, i32) {
    %c0_i32 = arith.constant 0 : i32
    %c0_i32_0 = arith.constant 0 : i32
    %c0_i32_1 = arith.constant 0 : i32
    return %arg0, %c0_i32, %arg1, %c0_i32_0 : i32, i32, i32, i32
  }
  func.func @transform_1(%arg0: i32, %arg1: i32) -> (i32, i32) {
    %c0_i32 = arith.constant 0 : i32
    %c0_i32_0 = arith.constant 0 : i32
    %c0_i32_1 = arith.constant 0 : i32
    return %c0_i32, %c0_i32_0 : i32, i32
  }
  func.func @transform_2(%arg0: i32, %arg1: i32) -> (i32, i32) {
    %c0_i32 = arith.constant 0 : i32
    %c0_i32_0 = arith.constant 0 : i32
    %c0_i32_1 = arith.constant 0 : i32
    return %c0_i32, %c0_i32_0 : i32, i32
  }
  func.func @transform_3(%arg0: i32, %arg1: i32) -> (i32, i32, i32, i32) {
    %c0_i32 = arith.constant 0 : i32
    %c0_i32_0 = arith.constant 0 : i32
    %c0_i32_1 = arith.constant 0 : i32
    return %arg0, %c0_i32, %arg1, %c0_i32_0 : i32, i32, i32, i32
  }
}

</mosaic_0001>

<llo_original>
// kernel: tpu_custom_call.1
$region0: #{tpu_custom_call.1}
  #allocation0 [shape = 'u32[]', space=smem, size = 0x4, offset = 0x4, fixed_abs, tag = 'smem constant byte address 0x4 - core index']
  #allocation1 [shape = 'u32[144,128]{1,0:T(1,128)}', space=vmem, size = 0x12000, scoped, tag = 'internal scratch']
  #allocation9 [shape = 's32[]', space=sflag, size = 0x4, offset = 0, fixed_abs, tag = 'sflag constant byte address 0x0 - dummy sync flag']
  #allocation11 [shape = 's32[]', space=sflag, size = 0x4, offset = 0, fixed_abs, tag = 'sflag constant byte address 0x0 - dummy sync flag']
  %s0 = inlined_call_operand.hbm [shape: f32[2,4,64,128], index: 0, kind: input, shape index: {}]
  %s1 = inlined_call_operand.hbm [shape: f32[128,128], index: 1, kind: input, shape index: {}]
  %s2 = inlined_call_operand.hbm [shape: f32[1,128], index: 2, kind: input, shape index: {}]
  %s3 = inlined_call_operand.hbm [shape: f32[2,4,64,128], index: 3, kind: output, shape index: {}]
  %s4 = sld [smem:[#allocation0]]
  $region57: #{tpu_custom_call.1} parent=0
    _
  %s6 = ssub.s32 1, %s4
  %s7 = scalar_select 0, %s6, %s4
  $region1: #{tpu_custom_call.1} parent=0
    #allocation2 [shape = 'u8[65536]{0}', space=vmem, size = 0x10000, scoped, tag = 'input window, operand 0']
    #allocation3 [shape = 's32[2]{0}', space=sflag, size = 0x8, scoped, tag = 'scoped memory for tpu_custom_call.1']
    #allocation4 [shape = 's32[2]{0}', space=sflag, size = 0x8, scoped, tag = 'scoped memory for tpu_custom_call.1']
    #allocation5 [shape = 'u8[65536]{0}', space=vmem, size = 0x10000, scoped, tag = 'input window, operand 1, single buffered']
    #allocation6 [shape = 's32[1]{0}', space=sflag, size = 0x4, scoped, tag = 'scoped memory for tpu_custom_call.1']
    #allocation7 [shape = 'u8[512]{0}', space=vmem, size = 0x400, scoped, tag = 'input window, operand 2, single buffered']
    #allocation8 [shape = 'u8[65536]{0}', space=vmem, size = 0x10000, scoped, tag = 'output window, operand 0']
    %8 = vsyncpa [#allocation3], 0
    %s9 = scalar_lea.sflag [#allocation3], 1
    %10 = vsyncpa %s9, 0
    %11 = vsyncpa [#allocation6], 0
    %12 = vsyncpa [#allocation4], 0
    %s13 = scalar_lea.sflag [#allocation4], 1
    %14 = vsyncpa %s13, 0
    loop: start=0, step=1, limit=10
    $region2: #{tpu_custom_call.1} parent=1 // loop_pre_header
      _
    $region3: #{tpu_custom_call.1} parent=1 // loop_header
      %s16 = sphi 0, %s20
      %p17 = scmp.ge.s32.totalorder %s16, 10
      %s23 = sphi 0, %s35
      %s24 = sphi 0, %s31
      %s25 = sphi 0, %s23
      %s26 = sphi 0, %s24
      %s27 = sphi 0, %s25
      %s28 = sphi 0, %s26
      %s40 = sphi 0, %s42
      %s43 = sphi 0, %s40
      %s44 = sphi 0, %s43
      %s60 = sphi 0, %s44
      %s64 = sphi 0, %s64
      %s66 = sphi 0, %s64
      %s67 = sphi 0, %s66
      %s81 = sphi 0, %s67
      %s85 = sphi 0, %s85
      %s87 = sphi 0, %s85
      %s88 = sphi 0, %s87
      %s102 = sphi 0, %s88
      %s110 = sphi 0, %s112
      %s113 = sphi 0, %s110
      %s114 = sphi 0, %s113
      %s130 = sphi 0, %s114
    $region4: #{tpu_custom_call.1} parent=1 // loop_header_branch
      %19 = sbr.rel (%p17) target = $region8
    $region5: #{tpu_custom_call.1} parent=1 // loop_body
      %s21 = ssub.s32 %s16, 1
      %s22 = ssub.s32 %s16, 2
      %s29 = sadd.s32 1, %s24
      %p30 = scmp.ge.s32.totalorder %s29, 4
      %s31 = scalar_select %p30, 0, %s29
      %s32 = sadd.s32 1, %s23
      %s33 = scalar_select %p30, %s32, %s23
      %p34 = scmp.ge.s32.totalorder %s33, 2
      %s35 = scalar_select %p34, 0, %s33
      %s36 = ssub.s32 %s23, %s35
      %s37 = ssub.s32 %s24, %s31
      %s38 = sor.u32 %s36, %s37
      %p39 = scmp.eq.s32.totalorder %s38, 0
      %s41 = sadd.s32 %s40, 1
      %s42 = scalar_select %p39, %s40, %s41
      %p45 = pneg %p39
      %p46 = scmp.eq.s32.totalorder %s16, 7
      %p47 = por %p45, %p46
      %p48 = scmp.ne.s32.totalorder %s40, %s43
      %p49 = scmp.eq.s32.totalorder %s16, 0
      %p50 = por %p48, %p49
      %p51 = scmp.ne.s32.totalorder %s40, %s43
      %p52 = scmp.eq.s32.totalorder %s21, 7
      %p53 = por %p51, %p52
      %p54 = scmp.ne.s32.totalorder %s43, %s44
      %p55 = scmp.eq.s32.totalorder %s21, 0
      %p56 = por %p54, %p55
      %p57 = scmp.ne.s32.totalorder %s43, %s44
      %p58 = scmp.eq.s32.totalorder %s22, 7
      %p59 = por %p57, %p58
      %p61 = scmp.ne.s32.totalorder %s44, %s60
      %p62 = scmp.eq.s32.totalorder %s22, 0
      %p63 = por %p61, %p62
      %s65 = sadd.s32 %s64, 1
      %p68 = scmp.eq.s32.totalorder %s16, 7
      %p69 = scmp.ne.s32.totalorder %s64, %s66
      %p70 = scmp.eq.s32.totalorder %s16, 0
      %p71 = por %p69, %p70
      %p72 = scmp.ne.s32.totalorder %s64, %s66
      %p73 = scmp.eq.s32.totalorder %s21, 7
      %p74 = por %p72, %p73
      %p75 = scmp.ne.s32.totalorder %s66, %s67
      %p76 = scmp.eq.s32.totalorder %s21, 0
      %p77 = por %p75, %p76
      %p78 = scmp.ne.s32.totalorder %s66, %s67
      %p79 = scmp.eq.s32.totalorder %s22, 7
      %p80 = por %p78, %p79
      %p82 = scmp.ne.s32.totalorder %s67, %s81
      %p83 = scmp.eq.s32.totalorder %s22, 0
      %p84 = por %p82, %p83
      %s86 = sadd.s32 %s85, 1
      %p89 = scmp.eq.s32.totalorder %s16, 7
      %p90 = scmp.ne.s32.totalorder %s85, %s87
      %p91 = scmp.eq.s32.totalorder %s16, 0
      %p92 = por %p90, %p91
      %p93 = scmp.ne.s32.totalorder %s85, %s87
      %p94 = scmp.eq.s32.totalorder %s21, 7
      %p95 = por %p93, %p94
      %p96 = scmp.ne.s32.totalorder %s87, %s88
      %p97 = scmp.eq.s32.totalorder %s21, 0
      %p98 = por %p96, %p97
      %p99 = scmp.ne.s32.totalorder %s87, %s88
      %p100 = scmp.eq.s32.totalorder %s22, 7
      %p101 = por %p99, %p100
      %p103 = scmp.ne.s32.totalorder %s88, %s102
      %p104 = scmp.eq.s32.totalorder %s22, 0
      %p105 = por %p103, %p104
      %s106 = ssub.s32 %s23, %s35
      %s107 = ssub.s32 %s24, %s31
      %s108 = sor.u32 %s106, %s107
      %p109 = scmp.eq.s32.totalorder %s108, 0
      %s111 = sadd.s32 %s110, 1
      %s112 = scalar_select %p109, %s110, %s111
      %p115 = pneg %p109
      %p116 = scmp.eq.s32.totalorder %s16, 7
      %p117 = por %p115, %p116
      %p118 = scmp.ne.s32.totalorder %s110, %s113
      %p119 = scmp.eq.s32.totalorder %s16, 0
      %p120 = por %p118, %p119
      %p121 = scmp.ne.s32.totalorder %s110, %s113
      %p122 = scmp.eq.s32.totalorder %s21, 7
      %p123 = por %p121, %p122
      %p124 = scmp.ne.s32.totalorder %s113, %s114
      %p125 = scmp.eq.s32.totalorder %s21, 0
      %p126 = por %p124, %p125
      %p127 = scmp.ne.s32.totalorder %s113, %s114
      %p128 = scmp.eq.s32.totalorder %s22, 7
      %p129 = por %p127, %p128
      %p131 = scmp.ne.s32.totalorder %s114, %s130
      %p132 = scmp.eq.s32.totalorder %s22, 0
      %p133 = por %p131, %p132
      %p134 = scmp.le.s32.totalorder 1, %s16
      %p135 = scmp.lt.s32.totalorder %s16, 9
      %p136 = pnand %p134, %p135
      %p137 = pneg %p136
      // Predicated region
      $region9: #{tpu_custom_call.1} parent=5 // pred_check
        _
      $region10: #{tpu_custom_call.1} parent=5 // pred_check_branch
        %139 = sbr.rel (%p136) target = $region12
      $region11: #{tpu_custom_call.1} parent=5 // pred_region
        %s140 = ssub.s32 %s16, 1
        // Predicated region
        $region13: #{tpu_custom_call.1} parent=11 // pred_check
          %p141 = pneg %p77
        $region14: #{tpu_custom_call.1} parent=11 // pred_check_branch
          %143 = sbr.rel (%p141) target = $region16
        $region15: #{tpu_custom_call.1} parent=11 // pred_region
          %s145 = ssub.s32 2048, 2048
          %146 = vsyncadd [#allocation6], %s145
          %s147 = sshll.u32 [#allocation5], 4
          %s148 = int_to_ptr.vmem [resolvable:$true] %s147
          %153 = dma.hbm_to_vmem [thread:$0]  %s1, 2048, %s148, [#allocation6], 128, 128, 8
        $region16: #{tpu_custom_call.1} parent=11 // pred_fallthru
          _
        // Predicated region
        $region17: #{tpu_custom_call.1} parent=11 // pred_check
          %p154 = pneg %p98
        $region18: #{tpu_custom_call.1} parent=11 // pred_check_branch
          %156 = sbr.rel (%p154) target = $region20
        $region19: #{tpu_custom_call.1} parent=11 // pred_region
          %s158 = ssub.s32 16, 16
          %159 = vsyncadd [#allocation6], %s158
          %s161 = sshll.u32 [#allocation7], 4
          %s162 = int_to_ptr.vmem [resolvable:$true] %s161
          %164 = dma.hbm_to_vmem [thread:$0]  %s2, 16, %s162, [#allocation6]
        $region20: #{tpu_custom_call.1} parent=11 // pred_fallthru
          _
      $region12: #{tpu_custom_call.1} parent=5 // pred_fallthru
        _
      %p165 = scmp.lt.s32.totalorder %s16, 8
      // Predicated region
      $region21: #{tpu_custom_call.1} parent=5 // pred_check
        %p166 = pneg %p165
      $region22: #{tpu_custom_call.1} parent=5 // pred_check_branch
        %168 = sbr.rel (%p166) target = $region24
      $region23: #{tpu_custom_call.1} parent=5 // pred_region
        // Predicated region
        $region25: #{tpu_custom_call.1} parent=23 // pred_check
          %p169 = pneg %p50
        $region26: #{tpu_custom_call.1} parent=23 // pred_check_branch
          %171 = sbr.rel (%p169) target = $region28
        $region27: #{tpu_custom_call.1} parent=23 // pred_region
          #allocation10 [shape = 'u32[6]{0}', space=smem, size = 0x18, scoped, tag = 'DMA stride descriptor']
          %s172 = sand.u32 %s40, 1
          %s173 = scalar_lea.sflag [#allocation3], %s172
          %s174 = sand.u32 %s40, 1
          %s175 = smul.addr %s174, 64
          %s176 = scalar_lea.vmem [#allocation2], %s175
          %s177 = smul.u32 2, %s24
          %s179 = ssub.s32 1024, 1024
          %180 = vsyncadd %s173, %s179
          %s181 = smul.addr %s23, 32
          %s182 = sadd.s32 %s177, %s181
          %s183 = smul.addr %s182, 128
          %s184 = scalar_lea.hbm %s0, %s183
          %s186 = sshll.u32 1, 14
          %s187 = sxor.u32 4294967295, %s186
          %s189 = sld [smem:[#allocation0]]
          %s190 = sadd.s32 2, %s189
          %s192 = sshll.u32 7, 26
          %s193 = sxor.u32 4294967295, %s192
          %s194 = sand.u32 0, %s193
          %s195 = sshll.u32 %s190, 26
          %s196 = sor.u32 %s194, %s195
          %s197 = sshll.u32 %s176, 4
          %s198 = int_to_ptr.vmem [resolvable:$true] %s197
          %204 = sst [smem:[#allocation10]] 1024
          %s205 = scalar_lea.smem [#allocation10], 1
          %206 = sst [smem:[%s205]] 256
          %s207 = scalar_lea.smem [#allocation10], 2
          %208 = sst [smem:[%s207]] 2
          %s209 = scalar_lea.smem [#allocation10], 3
          %210 = sst [smem:[%s209]] 128
          %s211 = scalar_lea.smem [#allocation10], 4
          %212 = sst [smem:[%s211]] 128
          %s213 = scalar_lea.smem [#allocation10], 5
          %214 = sst [smem:[%s213]] 8
          %216 = dma.general %s184, 1024, %s198, %s173, [#allocation9], [#allocation10], %s196, 0
        $region28: #{tpu_custom_call.1} parent=23 // pred_fallthru
          _
      $region24: #{tpu_custom_call.1} parent=5 // pred_fallthru
        _
      %p217 = scmp.le.s32.totalorder 1, %s16
      %p218 = scmp.lt.s32.totalorder %s16, 9
      %p219 = pnand %p217, %p218
      %p220 = pneg %p219
      // Predicated region
      $region29: #{tpu_custom_call.1} parent=5 // pred_check
        _
      $region30: #{tpu_custom_call.1} parent=5 // pred_check_branch
        %222 = sbr.rel (%p219) target = $region32
      $region31: #{tpu_custom_call.1} parent=5 // pred_region
        %s223 = ssub.s32 %s16, 1
        %s224 = sand.u32 %s43, 1
        %s225 = scalar_lea.sflag [#allocation3], %s224
        %s226 = sand.u32 %s43, 1
        %s227 = smul.addr %s226, 64
        %s228 = scalar_lea.vmem [#allocation2], %s227
        // Predicated region
        $region33: #{tpu_custom_call.1} parent=31 // pred_check
          %p229 = pneg %p56
        $region34: #{tpu_custom_call.1} parent=31 // pred_check_branch
          %231 = sbr.rel (%p229) target = $region36
        $region35: #{tpu_custom_call.1} parent=31 // pred_region
          %232 = dma.done %s225, 1024
        $region36: #{tpu_custom_call.1} parent=31 // pred_fallthru
          _
        // Predicated region
        $region37: #{tpu_custom_call.1} parent=31 // pred_check
          %p233 = pneg %p77
        $region38: #{tpu_custom_call.1} parent=31 // pred_check_branch
          %235 = sbr.rel (%p233) target = $region40
        $region39: #{tpu_custom_call.1} parent=31 // pred_region
          %236 = dma.done [#allocation6], 2048
        $region40: #{tpu_custom_call.1} parent=31 // pred_fallthru
          _
        // Predicated region
        $region41: #{tpu_custom_call.1} parent=31 // pred_check
          %p237 = pneg %p98
        $region42: #{tpu_custom_call.1} parent=31 // pred_check_branch
          %239 = sbr.rel (%p237) target = $region44
        $region43: #{tpu_custom_call.1} parent=31 // pred_region
          %240 = dma.done [#allocation6], 16
        $region44: #{tpu_custom_call.1} parent=31 // pred_fallthru
          _
        %s241 = sand.u32 %s43, 1
        %s242 = scalar_lea.sflag [#allocation3], %s241
        %s243 = sand.u32 %s43, 1
        %s244 = smul.addr %s243, 64
        %s245 = scalar_lea.vmem [#allocation2], %s244
        %p246 = pneg %p56
        %p247 = pneg %p53
        %p248 = pneg %p77
        %p249 = pneg %p74
        %p250 = pneg %p98
        %p251 = pneg %p95
        %p252 = pneg %p126
        %p253 = pneg %p123
        %s254 = sand.u32 %s113, 1
        %s255 = scalar_lea.sflag [#allocation4], %s254
        %s256 = sand.u32 %s113, 1
        %s257 = smul.addr %s256, 64
        %s258 = scalar_lea.vmem [#allocation8], %s257
        %s259 = smul.u32 2, %s26
        %s260 = smul.u32 2, %s26
        %v261 = vlaneseq
        %v262 = vand.u32 %v261, 127
        %vm263 = vcmp.lt.s32.totalorder %v262, 16
        %vm264 = vcmp.ge.s32.totalorder %v262, 16
        %vm265 = vcmp.lt.s32.totalorder %v262, 32
        %vm266 = vmand %vm264, %vm265
        %s267 = scalar_lea.vmem %s228, 16 [#allocation2]
        %v268 = vld [vmem:[%s267] sm:$0xff]
        %v269 = vld [vmem:[%s267 + $0x8] sm:$0xff]
        %v270 = vld [vmem:[%s228] sm:$0xff]
        %v271 = vld [vmem:[%s228 + $0x8] sm:$0xff]
        %v272 = vsel %vm266, 1, 0
        %vm273 = vcmp.eq.s32.totalorder %v272, 1
        %v274 = vsel %vm273, 0.0, %v270
        %v275 = vsel %vm273, 0.0, %v271
        %v276 = vsel %vm263, 1, 0
        %vm277 = vcmp.eq.s32.totalorder %v276, 1
        %v278 = vsel %vm277, %v268, %v274
        %v279 = vsel %vm277, %v269, %v275
        %v280 = vld [vmem:[#allocation5] sm:$0xff]
        %v281 = vld [vmem:[#allocation5 + $0x8] sm:$0xff]
        %v282 = vld [vmem:[#allocation5 + $0x10] sm:$0xff]
        %v283 = vld [vmem:[#allocation5 + $0x18] sm:$0xff]
        %v284 = vld [vmem:[#allocation5 + $0x20] sm:$0xff]
        %v285 = vld [vmem:[#allocation5 + $0x28] sm:$0xff]
        %v286 = vld [vmem:[#allocation5 + $0x30] sm:$0xff]
        %v287 = vld [vmem:[#allocation5 + $0x38] sm:$0xff]
        %v288 = vld [vmem:[#allocation5 + $0x40] sm:$0xff]
        %v289 = vld [vmem:[#allocation5 + $0x48] sm:$0xff]
        %v290 = vld [vmem:[#allocation5 + $0x50] sm:$0xff]
        %v291 = vld [vmem:[#allocation5 + $0x58] sm:$0xff]
        %v292 = vld [vmem:[#allocation5 + $0x60] sm:$0xff]
        %v293 = vld [vmem:[#allocation5 + $0x68] sm:$0xff]
        %v294 = vld [vmem:[#allocation5 + $0x70] sm:$0xff]
        %v295 = vld [vmem:[#allocation5 + $0x78] sm:$0xff]
        %v296 = vld [vmem:[#allocation7] sm:$0x1]
        %v298 = vlaneseq
        %v299 = vshrl.u32 %v298, 7
        %v300 = vsub.s32 0, %v299
        %v301 = vrot.slane %v296, %v300
        %303 = vmatprep.subr.mxu0 0.0
        %304 = vmatpush1.msra.mxu0 %v280
        %305 = vmatprep.subr.mxu0 0.0
        %306 = vmatpush1.msra.mxu0 %v281
        %307 = vmatprep.subr.mxu0 0.0
        %308 = vmatpush1.msra.mxu0 %v282
        %309 = vmatprep.subr.mxu0 0.0
        %310 = vmatpush1.msra.mxu0 %v283
        %311 = vmatprep.subr.mxu0 0.0
        %312 = vmatpush1.msra.mxu0 %v284
        %313 = vmatprep.subr.mxu0 0.0
        %314 = vmatpush1.msra.mxu0 %v285
        %315 = vmatprep.subr.mxu0 0.0
        %316 = vmatpush1.msra.mxu0 %v286
        %317 = vmatprep.subr.mxu0 0.0
        %318 = vmatpush1.msra.mxu0 %v287
        %319 = vmatprep.subr.mxu0 0.0
        %320 = vmatpush1.msra.mxu0 %v288
        %321 = vmatprep.subr.mxu0 0.0
        %322 = vmatpush1.msra.mxu0 %v289
        %323 = vmatprep.subr.mxu0 0.0
        %324 = vmatpush1.msra.mxu0 %v290
        %325 = vmatprep.subr.mxu0 0.0
        %326 = vmatpush1.msra.mxu0 %v291
        %327 = vmatprep.subr.mxu0 0.0
        %328 = vmatpush1.msra.mxu0 %v292
        %329 = vmatprep.subr.mxu0 0.0
        %330 = vmatpush1.msra.mxu0 %v293
        %331 = vmatprep.subr.mxu0 0.0
        %332 = vmatpush1.msra.mxu0 %v294
        %333 = vmatprep.subr.mxu0 0.0
        %334 = vmatpush1.msra.mxu0 %v295
        %335 = vmatprep.subr.mxu0 0.0
        %336 = vmatpush1.msra.mxu0 0.0
        %337 = vmatprep.subr.mxu0 0.0
        %338 = vmatpush1.msra.mxu0 0.0
        %339 = vmatprep.subr.mxu0 0.0
        %340 = vmatpush1.msra.mxu0 0.0
        %341 = vmatprep.subr.mxu0 0.0
        %342 = vmatpush1.msra.mxu0 0.0
        %343 = vmatprep.subr.mxu0 0.0
        %344 = vmatpush1.msra.mxu0 0.0
        %345 = vmatprep.subr.mxu0 0.0
        %346 = vmatpush1.msra.mxu0 0.0
        %347 = vmatprep.subr.mxu0 0.0
        %348 = vmatpush1.msra.mxu0 0.0
        %349 = vmatprep.subr.mxu0 0.0
        %350 = vmatpush1.msra.mxu0 0.0
        %351 = vmatprep.subr.mxu0 0.0
        %352 = vmatpush1.msra.mxu0 0.0
        %353 = vmatprep.subr.mxu0 0.0
        %354 = vmatpush1.msra.mxu0 0.0
        %355 = vmatprep.subr.mxu0 0.0
        %356 = vmatpush1.msra.mxu0 0.0
        %357 = vmatprep.subr.mxu0 0.0
        %358 = vmatpush1.msra.mxu0 0.0
        %359 = vmatprep.subr.mxu0 0.0
        %360 = vmatpush1.msra.mxu0 0.0
        %361 = vmatprep.subr.mxu0 0.0
        %362 = vmatpush1.msra.mxu0 0.0
        %363 = vmatprep.subr.mxu0 0.0
        %364 = vmatpush1.msra.mxu0 0.0
        %365 = vmatprep.subr.mxu0 0.0
        %366 = vmatpush1.msra.mxu0 0.0
        %367 = vmatprep.mubr.f32.mxu0 0.0
        %368 = vmatmul.mubr.f32.gmra.mrb[0].mxu0 %v278
        %v369 = vpop.f32.mrb[0].mxu0
        %v370 = vadd.f32 %v301, %v369
        %v371 = vpop.f32.mrb[0].mxu0
        %372 = vmatprep.mubr.f32.mxu0 0.0
        %373 = vmatmul.mubr.f32.gmra.mrb[0].mxu0 %v279
        %v374 = vpop.f32.mrb[0].mxu0
        %v375 = vadd.f32 %v301, %v374
        %v376 = vpop.f32.mrb[0].mxu0
        %377 = vdwg.mxu0
        %378 = vst [vmem:[%s258] sm:$0xff] %v370
        %379 = vst [vmem:[%s258 + $0x8] sm:$0xff] %v375
        %s380 = scalar_lea.vmem %s228, 32 [#allocation2]
        %v381 = vld [vmem:[%s380] sm:$0xff]
        %v382 = vld [vmem:[%s380 + $0x8] sm:$0xff]
        %v383 = vld [vmem:[%s380 + $0x10] sm:$0xff]
        %v384 = vld [vmem:[%s380 + $0x18] sm:$0xff]
        %v385 = vld [vmem:[%s228] sm:$0xff]
        %v386 = vld [vmem:[%s228 + $0x8] sm:$0xff]
        %v387 = vld [vmem:[%s228 + $0x10] sm:$0xff]
        %v388 = vld [vmem:[%s228 + $0x18] sm:$0xff]
        %v389 = vld [vmem:[%s267] sm:$0xff]
        %v390 = vld [vmem:[%s267 + $0x8] sm:$0xff]
        %v391 = vld [vmem:[%s267 + $0x10] sm:$0xff]
        %v392 = vld [vmem:[%s267 + $0x18] sm:$0xff]
        %v393 = vsel %vm273, %v385, %v389
        %v394 = vsel %vm273, %v386, %v390
        %v395 = vsel %vm273, %v387, %v391
        %v396 = vsel %vm273, %v388, %v392
        %v397 = vsel %vm277, %v381, %v393
        %v398 = vsel %vm277, %v382, %v394
        %v399 = vsel %vm277, %v383, %v395
        %v400 = vsel %vm277, %v384, %v396
        %v401 = vld [vmem:[#allocation5] sm:$0xff]
        %v402 = vld [vmem:[#allocation5 + $0x8] sm:$0xff]
        %v403 = vld [vmem:[#allocation5 + $0x10] sm:$0xff]
        %v404 = vld [vmem:[#allocation5 + $0x18] sm:$0xff]
        %v405 = vld [vmem:[#allocation5 + $0x20] sm:$0xff]
        %v406 = vld [vmem:[#allocation5 + $0x28] sm:$0xff]
        %v407 = vld [vmem:[#allocation5 + $0x30] sm:$0xff]
        %v408 = vld [vmem:[#allocation5 + $0x38] sm:$0xff]
        %v409 = vld [vmem:[#allocation5 + $0x40] sm:$0xff]
        %v410 = vld [vmem:[#allocation5 + $0x48] sm:$0xff]
        %v411 = vld [vmem:[#allocation5 + $0x50] sm:$0xff]
        %v412 = vld [vmem:[#allocation5 + $0x58] sm:$0xff]
        %v413 = vld [vmem:[#allocation5 + $0x60] sm:$0xff]
        %v414 = vld [vmem:[#allocation5 + $0x68] sm:$0xff]
        %v415 = vld [vmem:[#allocation5 + $0x70] sm:$0xff]
        %v416 = vld [vmem:[#allocation5 + $0x78] sm:$0xff]
        %v417 = vld [vmem:[#allocation7] sm:$0x1]
        %v419 = vlaneseq
        %v420 = vshrl.u32 %v419, 7
        %v421 = vsub.s32 0, %v420
        %v422 = vrot.slane %v417, %v421
        %424 = vmatprep.subr.mxu0 0.0
        %425 = vmatpush1.msra.mxu0 %v401
        %426 = vmatprep.subr.mxu0 0.0
        %427 = vmatpush1.msra.mxu0 %v402
        %428 = vmatprep.subr.mxu0 0.0
        %429 = vmatpush1.msra.mxu0 %v403
        %430 = vmatprep.subr.mxu0 0.0
        %431 = vmatpush1.msra.mxu0 %v404
        %432 = vmatprep.subr.mxu0 0.0
        %433 = vmatpush1.msra.mxu0 %v405
        %434 = vmatprep.subr.mxu0 0.0
        %435 = vmatpush1.msra.mxu0 %v406
        %436 = vmatprep.subr.mxu0 0.0
        %437 = vmatpush1.msra.mxu0 %v407
        %438 = vmatprep.subr.mxu0 0.0
        %439 = vmatpush1.msra.mxu0 %v408
        %440 = vmatprep.subr.mxu0 0.0
        %441 = vmatpush1.msra.mxu0 %v409
        %442 = vmatprep.subr.mxu0 0.0
        %443 = vmatpush1.msra.mxu0 %v410
        %444 = vmatprep.subr.mxu0 0.0
        %445 = vmatpush1.msra.mxu0 %v411
        %446 = vmatprep.subr.mxu0 0.0
        %447 = vmatpush1.msra.mxu0 %v412
        %448 = vmatprep.subr.mxu0 0.0
        %449 = vmatpush1.msra.mxu0 %v413
        %450 = vmatprep.subr.mxu0 0.0
        %451 = vmatpush1.msra.mxu0 %v414
        %452 = vmatprep.subr.mxu0 0.0
        %453 = vmatpush1.msra.mxu0 %v415
        %454 = vmatprep.subr.mxu0 0.0
        %455 = vmatpush1.msra.mxu0 %v416
        %456 = vmatprep.subr.mxu0 0.0
        %457 = vmatpush1.msra.mxu0 0.0
        %458 = vmatprep.subr.mxu0 0.0
        %459 = vmatpush1.msra.mxu0 0.0
        %460 = vmatprep.subr.mxu0 0.0
        %461 = vmatpush1.msra.mxu0 0.0
        %462 = vmatprep.subr.mxu0 0.0
        %463 = vmatpush1.msra.mxu0 0.0
        %464 = vmatprep.subr.mxu0 0.0
        %465 = vmatpush1.msra.mxu0 0.0
        %466 = vmatprep.subr.mxu0 0.0
        %467 = vmatpush1.msra.mxu0 0.0
        %468 = vmatprep.subr.mxu0 0.0
        %469 = vmatpush1.msra.mxu0 0.0
        %470 = vmatprep.subr.mxu0 0.0
        %471 = vmatpush1.msra.mxu0 0.0
        %472 = vmatprep.subr.mxu0 0.0
        %473 = vmatpush1.msra.mxu0 0.0
        %474 = vmatprep.subr.mxu0 0.0
        %475 = vmatpush1.msra.mxu0 0.0
        %476 = vmatprep.subr.mxu0 0.0
        %477 = vmatpush1.msra.mxu0 0.0
        %478 = vmatprep.subr.mxu0 0.0
        %479 = vmatpush1.msra.mxu0 0.0
        %480 = vmatprep.subr.mxu0 0.0
        %481 = vmatpush1.msra.mxu0 0.0
        %482 = vmatprep.subr.mxu0 0.0
        %483 = vmatpush1.msra.mxu0 0.0
        %484 = vmatprep.subr.mxu0 0.0
        %485 = vmatpush1.msra.mxu0 0.0
        %486 = vmatprep.subr.mxu0 0.0
        %487 = vmatpush1.msra.mxu0 0.0
        %488 = vmatprep.mubr.f32.mxu0 0.0
        %489 = vmatmul.mubr.f32.gmra.mrb[0].mxu0 %v397
        %v490 = vpop.f32.mrb[0].mxu0
        %v491 = vadd.f32 %v422, %v490
        %v492 = vpop.f32.mrb[0].mxu0
        %493 = vmatprep.mubr.f32.mxu0 0.0
        %494 = vmatmul.mubr.f32.gmra.mrb[0].mxu0 %v398
        %v495 = vpop.f32.mrb[0].mxu0
        %v496 = vadd.f32 %v422, %v495
        %v497 = vpop.f32.mrb[0].mxu0
        %498 = vmatprep.mubr.f32.mxu0 0.0
        %499 = vmatmul.mubr.f32.gmra.mrb[0].mxu0 %v399
        %v500 = vpop.f32.mrb[0].mxu0
        %v501 = vadd.f32 %v422, %v500
        %v502 = vpop.f32.mrb[0].mxu0
        %503 = vmatprep.mubr.f32.mxu0 0.0
        %504 = vmatmul.mubr.f32.gmra.mrb[0].mxu0 %v400
        %v505 = vpop.f32.mrb[0].mxu0
        %v506 = vadd.f32 %v422, %v505
        %v507 = vpop.f32.mrb[0].mxu0
        %508 = vdwg.mxu0
        %s509 = scalar_lea.vmem %s258, 16 [#allocation8]
        %510 = vst [vmem:[%s509] sm:$0xff] %v491
        %511 = vst [vmem:[%s509 + $0x8] sm:$0xff] %v496
        %512 = vst [vmem:[%s509 + $0x10] sm:$0xff] %v501
        %513 = vst [vmem:[%s509 + $0x18] sm:$0xff] %v506
        %v514 = vld [vmem:[%s380] sm:$0xff]
        %v515 = vld [vmem:[%s380 + $0x8] sm:$0xff]
        %s516 = scalar_lea.vmem %s228, 48 [#allocation2]
        %v517 = vld [vmem:[%s516] sm:$0xff]
        %v518 = vld [vmem:[%s516 + $0x8] sm:$0xff]
        %v519 = vsel %vm273, %v514, %v517
        %v520 = vsel %vm273, %v515, %v518
        %v521 = vsel %vm277, 0.0, %v519
        %v522 = vsel %vm277, 0.0, %v520
        %v523 = vld [vmem:[#allocation5] sm:$0xff]
        %v524 = vld [vmem:[#allocation5 + $0x8] sm:$0xff]
        %v525 = vld [vmem:[#allocation5 + $0x10] sm:$0xff]
        %v526 = vld [vmem:[#allocation5 + $0x18] sm:$0xff]
        %v527 = vld [vmem:[#allocation5 + $0x20] sm:$0xff]
        %v528 = vld [vmem:[#allocation5 + $0x28] sm:$0xff]
        %v529 = vld [vmem:[#allocation5 + $0x30] sm:$0xff]
        %v530 = vld [vmem:[#allocation5 + $0x38] sm:$0xff]
        %v531 = vld [vmem:[#allocation5 + $0x40] sm:$0xff]
        %v532 = vld [vmem:[#allocation5 + $0x48] sm:$0xff]
        %v533 = vld [vmem:[#allocation5 + $0x50] sm:$0xff]
        %v534 = vld [vmem:[#allocation5 + $0x58] sm:$0xff]
        %v535 = vld [vmem:[#allocation5 + $0x60] sm:$0xff]
        %v536 = vld [vmem:[#allocation5 + $0x68] sm:$0xff]
        %v537 = vld [vmem:[#allocation5 + $0x70] sm:$0xff]
        %v538 = vld [vmem:[#allocation5 + $0x78] sm:$0xff]
        %v539 = vld [vmem:[#allocation7] sm:$0x1]
        %v541 = vlaneseq
        %v542 = vshrl.u32 %v541, 7
        %v543 = vsub.s32 0, %v542
        %v544 = vrot.slane %v539, %v543
        %546 = vmatprep.subr.mxu0 0.0
        %547 = vmatpush1.msra.mxu0 %v523
        %548 = vmatprep.subr.mxu0 0.0
        %549 = vmatpush1.msra.mxu0 %v524
        %550 = vmatprep.subr.mxu0 0.0
        %551 = vmatpush1.msra.mxu0 %v525
        %552 = vmatprep.subr.mxu0 0.0
        %553 = vmatpush1.msra.mxu0 %v526
        %554 = vmatprep.subr.mxu0 0.0
        %555 = vmatpush1.msra.mxu0 %v527
        %556 = vmatprep.subr.mxu0 0.0
        %557 = vmatpush1.msra.mxu0 %v528
        %558 = vmatprep.subr.mxu0 0.0
        %559 = vmatpush1.msra.mxu0 %v529
        %560 = vmatprep.subr.mxu0 0.0
        %561 = vmatpush1.msra.mxu0 %v530
        %562 = vmatprep.subr.mxu0 0.0
        %563 = vmatpush1.msra.mxu0 %v531
        %564 = vmatprep.subr.mxu0 0.0
        %565 = vmatpush1.msra.mxu0 %v532
        %566 = vmatprep.subr.mxu0 0.0
        %567 = vmatpush1.msra.mxu0 %v533
        %568 = vmatprep.subr.mxu0 0.0
        %569 = vmatpush1.msra.mxu0 %v534
        %570 = vmatprep.subr.mxu0 0.0
        %571 = vmatpush1.msra.mxu0 %v535
        %572 = vmatprep.subr.mxu0 0.0
        %573 = vmatpush1.msra.mxu0 %v536
        %574 = vmatprep.subr.mxu0 0.0
        %575 = vmatpush1.msra.mxu0 %v537
        %576 = vmatprep.subr.mxu0 0.0
        %577 = vmatpush1.msra.mxu0 %v538
        %578 = vmatprep.subr.mxu0 0.0
        %579 = vmatpush1.msra.mxu0 0.0
        %580 = vmatprep.subr.mxu0 0.0
        %581 = vmatpush1.msra.mxu0 0.0
        %582 = vmatprep.subr.mxu0 0.0
        %583 = vmatpush1.msra.mxu0 0.0
        %584 = vmatprep.subr.mxu0 0.0
        %585 = vmatpush1.msra.mxu0 0.0
        %586 = vmatprep.subr.mxu0 0.0
        %587 = vmatpush1.msra.mxu0 0.0
        %588 = vmatprep.subr.mxu0 0.0
        %589 = vmatpush1.msra.mxu0 0.0
        %590 = vmatprep.subr.mxu0 0.0
        %591 = vmatpush1.msra.mxu0 0.0
        %592 = vmatprep.subr.mxu0 0.0
        %593 = vmatpush1.msra.mxu0 0.0
        %594 = vmatprep.subr.mxu0 0.0
        %595 = vmatpush1.msra.mxu0 0.0
        %596 = vmatprep.subr.mxu0 0.0
        %597 = vmatpush1.msra.mxu0 0.0
        %598 = vmatprep.subr.mxu0 0.0
        %599 = vmatpush1.msra.mxu0 0.0
        %600 = vmatprep.subr.mxu0 0.0
        %601 = vmatpush1.msra.mxu0 0.0
        %602 = vmatprep.subr.mxu0 0.0
        %603 = vmatpush1.msra.mxu0 0.0
        %604 = vmatprep.subr.mxu0 0.0
        %605 = vmatpush1.msra.mxu0 0.0
        %606 = vmatprep.subr.mxu0 0.0
        %607 = vmatpush1.msra.mxu0 0.0
        %608 = vmatprep.subr.mxu0 0.0
        %609 = vmatpush1.msra.mxu0 0.0
        %610 = vmatprep.mubr.f32.mxu0 0.0
        %611 = vmatmul.mubr.f32.gmra.mrb[0].mxu0 %v521
        %v612 = vpop.f32.mrb[0].mxu0
        %v613 = vadd.f32 %v544, %v612
        %v614 = vpop.f32.mrb[0].mxu0
        %615 = vmatprep.mubr.f32.mxu0 0.0
        %616 = vmatmul.mubr.f32.gmra.mrb[0].mxu0 %v522
        %v617 = vpop.f32.mrb[0].mxu0
        %v618 = vadd.f32 %v544, %v617
        %v619 = vpop.f32.mrb[0].mxu0
        %620 = vdwg.mxu0
        %s621 = scalar_lea.vmem %s258, 48 [#allocation8]
        %622 = vst [vmem:[%s621] sm:$0xff] %v613
        %623 = vst [vmem:[%s621 + $0x8] sm:$0xff] %v618
        %s624 = sand.u32 %s113, 1
        %s625 = scalar_lea.sflag [#allocation4], %s624
        %s626 = sand.u32 %s113, 1
        %s627 = smul.addr %s626, 64
        %s628 = scalar_lea.vmem [#allocation8], %s627
        // Predicated region
        $region45: #{tpu_custom_call.1} parent=31 // pred_check
          %p629 = pneg %p123
        $region46: #{tpu_custom_call.1} parent=31 // pred_check_branch
          %631 = sbr.rel (%p629) target = $region48
        $region47: #{tpu_custom_call.1} parent=31 // pred_region
          #allocation12 [shape = 'u32[6]{0}', space=smem, size = 0x18, scoped, tag = 'DMA stride descriptor']
          %s632 = smul.u32 2, %s26
          %s634 = ssub.s32 1024, 1024
          %635 = vsyncadd %s625, %s634
          %s636 = smul.addr %s25, 32
          %s637 = sadd.s32 %s632, %s636
          %s638 = smul.addr %s637, 128
          %s639 = scalar_lea.hbm %s3, %s638
          %s641 = sshll.u32 1, 14
          %s642 = sxor.u32 4294967295, %s641
          %s645 = sshll.u32 7, 18
          %s646 = sxor.u32 4294967295, %s645
          %s647 = sand.u32 0, %s646
          %s649 = sor.u32 %s647, 0
          %s651 = sshll.u32 3, 24
          %s652 = sxor.u32 4294967295, %s651
          %s653 = sand.u32 %s649, %s652
          %s655 = sor.u32 %s653, 0
          %s656 = sshll.u32 %s628, 4
          %s657 = int_to_ptr.vmem [resolvable:$true] %s656
          %663 = sst [smem:[#allocation12]] 256
          %s664 = scalar_lea.smem [#allocation12], 1
          %665 = sst [smem:[%s664]] 1024
          %s666 = scalar_lea.smem [#allocation12], 2
          %667 = sst [smem:[%s666]] 2
          %s668 = scalar_lea.smem [#allocation12], 3
          %669 = sst [smem:[%s668]] 128
          %s670 = scalar_lea.smem [#allocation12], 4
          %671 = sst [smem:[%s670]] 128
          %s672 = scalar_lea.smem [#allocation12], 5
          %673 = sst [smem:[%s672]] 8
          %675 = dma.general %s657, 1024, %s639, %s625, [#allocation11], [#allocation12], %s655, 0
        $region48: #{tpu_custom_call.1} parent=31 // pred_fallthru
          _
      $region32: #{tpu_custom_call.1} parent=5 // pred_fallthru
        _
      %p676 = scmp.le.s32.totalorder 2, %s16
      // Predicated region
      $region49: #{tpu_custom_call.1} parent=5 // pred_check
        %p677 = pneg %p676
      $region50: #{tpu_custom_call.1} parent=5 // pred_check_branch
        %679 = sbr.rel (%p677) target = $region52
      $region51: #{tpu_custom_call.1} parent=5 // pred_region
        %s680 = ssub.s32 %s16, 2
        // Predicated region
        $region53: #{tpu_custom_call.1} parent=51 // pred_check
          %p681 = pneg %p129
        $region54: #{tpu_custom_call.1} parent=51 // pred_check_branch
          %683 = sbr.rel (%p681) target = $region56
        $region55: #{tpu_custom_call.1} parent=51 // pred_region
          %s684 = sand.u32 %s114, 1
          %s685 = scalar_lea.sflag [#allocation4], %s684
          %s686 = sand.u32 %s114, 1
          %s687 = smul.addr %s686, 64
          %s688 = scalar_lea.vmem [#allocation8], %s687
          %689 = dma.done %s685, 1024
        $region56: #{tpu_custom_call.1} parent=51 // pred_fallthru
          _
      $region52: #{tpu_custom_call.1} parent=5 // pred_fallthru
        _
    $region6: #{tpu_custom_call.1} parent=1 // loop_footer
      %s20 = sadd.s32 1, %s16
    $region7: #{tpu_custom_call.1} parent=1 // loop_footer_branch
      %15 = sbr.rel target = $region3
    $region8: #{tpu_custom_call.1} parent=1 // loop_exit
      _
    %690 = vsyncpa [#allocation3], 1
    %s691 = scalar_lea.sflag [#allocation3], 1
    %692 = vsyncpa %s691, 1
    %693 = vsyncpa [#allocation6], 1
    %694 = vsyncpa [#allocation4], 1
    %s695 = scalar_lea.sflag [#allocation4], 1
    %696 = vsyncpa %s695, 1

</llo_original>
